<compile_context>
chip_gen: v6e
topology: v6e:2x2x1
jax: 0.10.0
libtpu: 0.0.40
codegen_flags: <defaults>
</compile_context>

<pallas_src>
import functools

import jax
import jax.numpy as jnp
from jax.experimental import pallas as pl
from jax.experimental.pallas import tpu as pltpu


# Contract the last dim of both operands: a[M,K] (x) b[N,K] -> [M,N].
# No explicit transpose is materialized (feeds the MXU in natural layout).
_CONTRACT_LAST = (((1,), (1,)), ((), ()))


def _matmul_nt(a, b):
    return jax.lax.dot_general(a, b, _CONTRACT_LAST,
                               preferred_element_type=jnp.float32)


def _pick_tile(n, target):
    """Largest divisor of n that is <= target."""
    t = min(n, target)
    while n % t:
        t -= 1
    return t


def _const_spec(shape):
    """BlockSpec for an operand whose block never changes across the grid.

    Single-buffered (pl.Buffered(1)): the block is DMA'd once and kept
    resident, halving its VMEM footprint vs. default double-buffering.
    """
    zeros = (0,) * len(shape)
    return pl.BlockSpec(shape, lambda *_: zeros, pipeline_mode=pl.Buffered(1))


# ----------------------------------------------------------------------------
# Pass 1: projections (batch*seq folded into the matmul M dimension)
# ----------------------------------------------------------------------------

def _q_proj_kernel(x_ref, w_ref, b_ref, o_ref, *, scale):
    # x: [tr, E], w: [E_out, E_in] (torch layout), b: [1, E] (f32).
    acc = _matmul_nt(x_ref[...], w_ref[...])
    o_ref[...] = ((acc + b_ref[...]) * scale).astype(o_ref.dtype)


def _kv_proj_kernel(x_ref, wk_ref, bk_ref, wv_ref, bv_ref, k_ref, v_ref):
    x = x_ref[...]
    k_ref[...] = (_matmul_nt(x, wk_ref[...]) + bk_ref[...]).astype(k_ref.dtype)
    v_ref[...] = (_matmul_nt(x, wv_ref[...]) + bv_ref[...]).astype(v_ref.dtype)


def _project_q(x2d, wq, bq_row, scale, row_tile, out_dtype):
    R, E = x2d.shape
    tr = _pick_tile(R, row_tile)
    grid_spec = pltpu.PrefetchScalarGridSpec(
        num_scalar_prefetch=0,
        grid=(R // tr,),
        in_specs=[
            pl.BlockSpec((tr, E), lambda i: (i, 0)),   # x rows
            _const_spec((E, E)),                       # Wq  ([out, in])
            _const_spec((1, E)),                       # bq  (f32)
        ],
        out_specs=pl.BlockSpec((tr, E), lambda i: (i, 0)),
    )
    return pl.pallas_call(
        functools.partial(_q_proj_kernel, scale=scale),
        out_shape=jax.ShapeDtypeStruct((R, E), out_dtype),
        grid_spec=grid_spec,
        compiler_params=pltpu.CompilerParams(
            dimension_semantics=("parallel",)),
    )(x2d, wq, bq_row)


def _project_kv(x2d, wk, bk_row, wv, bv_row, row_tile, out_dtype):
    R, E = x2d.shape
    tr = _pick_tile(R, row_tile)
    grid_spec = pltpu.PrefetchScalarGridSpec(
        num_scalar_prefetch=0,
        grid=(R // tr,),
        in_specs=[
            pl.BlockSpec((tr, E), lambda i: (i, 0)),   # x2 rows (read once for K and V)
            _const_spec((E, E)),                       # Wk
            _const_spec((1, E)),                       # bk
            _const_spec((E, E)),                       # Wv
            _const_spec((1, E)),                       # bv
        ],
        out_specs=[
            pl.BlockSpec((tr, E), lambda i: (i, 0)),
            pl.BlockSpec((tr, E), lambda i: (i, 0)),
        ],
    )
    return pl.pallas_call(
        _kv_proj_kernel,
        out_shape=(jax.ShapeDtypeStruct((R, E), out_dtype),
                   jax.ShapeDtypeStruct((R, E), out_dtype)),
        grid_spec=grid_spec,
        compiler_params=pltpu.CompilerParams(
            dimension_semantics=("parallel",)),
    )(x2d, wk, bk_row, wv, bv_row)


# ----------------------------------------------------------------------------
# Pass 2: flash attention (online softmax over k-tiles)
# ----------------------------------------------------------------------------

def _flash_attention_kernel(q_ref, k_ref, v_ref, o_ref, m_sc, l_sc, acc_sc):
    ki = pl.program_id(2)

    @pl.when(ki == 0)
    def _():
        m_sc[...] = jnp.full_like(m_sc, -jnp.inf)
        l_sc[...] = jnp.zeros_like(l_sc)
        acc_sc[...] = jnp.zeros_like(acc_sc)

    # Scores [tq, tk]: contract last dims (q is already pre-scaled).
    s = _matmul_nt(q_ref[...], k_ref[...])

    m_prev = m_sc[...]
    m_new = jnp.maximum(m_prev, jnp.max(s, axis=-1, keepdims=True))
    alpha = jnp.exp(m_prev - m_new)
    p = jnp.exp(s - m_new)

    l_sc[...] = alpha * l_sc[...] + jnp.sum(p, axis=-1, keepdims=True)
    acc_sc[...] = alpha * acc_sc[...] + jnp.dot(
        p.astype(v_ref.dtype), v_ref[...], preferred_element_type=jnp.float32)
    m_sc[...] = m_new

    @pl.when(ki == pl.num_programs(2) - 1)
    def _():
        o_ref[...] = (acc_sc[...] *
                      pl.reciprocal(l_sc[...], approx=True)).astype(o_ref.dtype)


def _flash_attention(q, k, v, out_dtype, tq_target, tk_target):
    B, Sq, E = q.shape
    _, Sk, _ = k.shape
    tq = _pick_tile(Sq, tq_target)
    tk = _pick_tile(Sk, tk_target)

    grid_spec = pltpu.PrefetchScalarGridSpec(
        num_scalar_prefetch=0,
        grid=(B, Sq // tq, Sk // tk),
        in_specs=[
            pl.BlockSpec((pl.Squeezed(), tq, E), lambda b, qi, ki: (b, qi, 0)),  # Q
            pl.BlockSpec((pl.Squeezed(), tk, E), lambda b, qi, ki: (b, ki, 0)),  # K
            pl.BlockSpec((pl.Squeezed(), tk, E), lambda b, qi, ki: (b, ki, 0)),  # V
        ],
        out_specs=pl.BlockSpec((pl.Squeezed(), tq, E),
                               lambda b, qi, ki: (b, qi, 0)),
        scratch_shapes=[
            pltpu.VMEM((tq, 1), jnp.float32),   # running max  m
            pltpu.VMEM((tq, 1), jnp.float32),   # running sum  l
            pltpu.VMEM((tq, E), jnp.float32),   # output accumulator
        ],
    )
    return pl.pallas_call(
        _flash_attention_kernel,
        out_shape=jax.ShapeDtypeStruct((B, Sq, E), out_dtype),
        grid_spec=grid_spec,
        compiler_params=pltpu.CompilerParams(
            dimension_semantics=("parallel", "parallel", "arbitrary")),
    )(q, k, v)


# ----------------------------------------------------------------------------
# Public wrapper (matches the PyTorch CrossAttention forward)
# ----------------------------------------------------------------------------

def cross_attention(x1, x2, wq, bq, wk, bk, wv, bv, *,
                    compute_dtype=None, row_tile=512, tq=256, tk=512):
    """x1: [B, Sq, E], x2: [B, Sk, E]; weights in PyTorch nn.Linear layout [out, in].

    compute_dtype: optional (e.g. jnp.bfloat16) — activations/weights are cast
    before the kernels; all matmuls still accumulate in f32 and biases stay f32.
    Note: with E < 128 (as in the test config) output stores are lane-masked;
    for E >= 128 the output slab is already lane-dense.
    """
    B, Sq, E = x1.shape
    _, Sk, _ = x2.shape
    out_dtype = x1.dtype
    cdt = jnp.dtype(compute_dtype) if compute_dtype is not None else x1.dtype
    scale = float(E) ** (-0.5)

    x1c = x1.astype(cdt)
    x2c = x2.astype(cdt)
    wqc, wkc, wvc = (w.astype(cdt) for w in (wq, wk, wv))
    bq2 = bq.reshape(1, E).astype(jnp.float32)
    bk2 = bk.reshape(1, E).astype(jnp.float32)
    bv2 = bv.reshape(1, E).astype(jnp.float32)

    # Pass 1: projections with batch*seq folded into the matmul M dimension.
    q = _project_q(x1c.reshape(B * Sq, E), wqc, bq2, scale, row_tile, cdt)
    k, v = _project_kv(x2c.reshape(B * Sk, E), wkc, bk2, wvc, bv2, row_tile, cdt)
    q = q.reshape(B, Sq, E)
    k = k.reshape(B, Sk, E)
    v = v.reshape(B, Sk, E)

    # Pass 2: flash attention over (batch, q-tile, k-tile).
    return _flash_attention(q, k, v, out_dtype, tq, tk)


def cross_attention_ref(x1, x2, wq, bq, wk, bk, wv, bv):
    """Pure-JAX reference mirroring the PyTorch forward."""
    E = x1.shape[-1]
    scale = float(E) ** (-0.5)
    q = jnp.einsum("bse,oe->bso", x1, wq) + bq
    k = jnp.einsum("bse,oe->bso", x2, wk) + bk
    v = jnp.einsum("bse,oe->bso", x2, wv) + bv
    s = jnp.einsum("bqe,bke->bqk", q, k) * scale
    w = jax.nn.softmax(s, axis=-1)
    return jnp.einsum("bqk,bke->bqe", w, v)


if __name__ == "__main__":
    B, Sq, Sk, E = 2, 8, 8, 32

    key = jax.random.PRNGKey(0)
    keys = jax.random.split(key, 8)

    x1 = jax.random.normal(keys[0], (B, Sq, E), dtype=jnp.float32)
    x2 = jax.random.normal(keys[1], (B, Sk, E), dtype=jnp.float32)

    # PyTorch nn.Linear layout: weight [out, in], bias [out].
    bound = 1.0 / (E ** 0.5)
    wq = jax.random.uniform(keys[2], (E, E), minval=-bound, maxval=bound)
    wk = jax.random.uniform(keys[3], (E, E), minval=-bound, maxval=bound)
    wv = jax.random.uniform(keys[4], (E, E), minval=-bound, maxval=bound)
    bq = jax.random.uniform(keys[5], (E,), minval=-bound, maxval=bound)
    bk = jax.random.uniform(keys[6], (E,), minval=-bound, maxval=bound)
    bv = jax.random.uniform(keys[7], (E,), minval=-bound, maxval=bound)

    ref = cross_attention_ref(x1, x2, wq, bq, wk, bk, wv, bv)

    # float32 compute path (tolerance loosened slightly for the EUP approx
    # reciprocal used in the softmax normalization).
    out = jax.block_until_ready(cross_attention(x1, x2, wq, bq, wk, bk, wv, bv))
    assert out.shape == (B, Sq, E), out.shape
    assert out.dtype == x1.dtype, out.dtype
    err_f32 = float(jnp.max(jnp.abs(out - ref)))
    assert err_f32 < 2e-2, err_f32

    # bfloat16 compute path (v6e/v7x MXU-friendly), f32 accumulation inside.
    out_bf16 = jax.block_until_ready(
        cross_attention(x1, x2, wq, bq, wk, bk, wv, bv,
                        compute_dtype=jnp.bfloat16))
    err_bf16 = float(jnp.max(jnp.abs(out_bf16.astype(jnp.float32) - ref)))
    assert err_bf16 < 8e-2, err_bf16

    print("KERNEL_OK")
</pallas_src>

<mosaic_0001>
module attributes {stable_mosaic.version = 11 : i64} {
  func.func @_q_proj_kernel(%arg0: i32, %arg1: memref<16x32xf32, #tpu.memory_space<vmem>>, %arg2: memref<32x32xf32, #tpu.memory_space<vmem>>, %arg3: memref<1x32xf32, #tpu.memory_space<vmem>>, %arg4: memref<16x32xf32, #tpu.memory_space<vmem>>) attributes {dimension_semantics = [#tpu.dimension_semantics<parallel>], iteration_bounds = array<i64: 1>, scalar_prefetch = 0 : i64, scratch_operands = 0 : i64, tpu.core_type = #tpu.core_type<tc>, window_params = [{transform_indices = @transform_0, window_bounds = array<i64: 16, 32>}, {pipeline_mode = #tpu.pipeline_mode<synchronous>, transform_indices = @transform_1, window_bounds = array<i64: 32, 32>}, {pipeline_mode = #tpu.pipeline_mode<synchronous>, transform_indices = @transform_2, window_bounds = array<i64: 1, 32>}, {transform_indices = @transform_3, window_bounds = array<i64: 16, 32>}]} {
    %c0 = arith.constant 0 : index
    %c0_0 = arith.constant 0 : index
    %0 = vector.load %arg1[%c0, %c0_0] : memref<16x32xf32, #tpu.memory_space<vmem>>, vector<16x32xf32>
    %c0_1 = arith.constant 0 : index
    %c0_2 = arith.constant 0 : index
    %1 = vector.load %arg2[%c0_1, %c0_2] : memref<32x32xf32, #tpu.memory_space<vmem>>, vector<32x32xf32>
    %cst = arith.constant dense<0.000000e+00> : vector<16x32xf32>
    %2 = tpu.matmul %0, %1, %cst {dimension_numbers = #tpu.dot_dimension_numbers<[1], [1], [0], [0], [0, 0, 1, 0], [], []>} : vector<16x32xf32>, vector<32x32xf32>, vector<16x32xf32> -> vector<16x32xf32>
    %c0_3 = arith.constant 0 : index
    %c0_4 = arith.constant 0 : index
    %3 = vector.load %arg3[%c0_3, %c0_4] : memref<1x32xf32, #tpu.memory_space<vmem>>, vector<1x32xf32>
    %4 = vector.broadcast %3 : vector<1x32xf32> to vector<16x32xf32>
    %5 = arith.addf %2, %4 : vector<16x32xf32>
    %cst_5 = arith.constant 0.176776692 : f32
    %6 = vector.broadcast %cst_5 : f32 to vector<16x32xf32>
    %7 = arith.mulf %5, %6 : vector<16x32xf32>
    %c0_6 = arith.constant 0 : index
    %c0_7 = arith.constant 0 : index
    %8 = vector.load %arg4[%c0_6, %c0_7] : memref<16x32xf32, #tpu.memory_space<vmem>>, vector<16x32xf32>
    tpu.vector_store %arg4[%c0_6, %c0_7], %7 {strides = array<i32>} : memref<16x32xf32, #tpu.memory_space<vmem>>, vector<16x32xf32>,
    return
  }
  func.func @transform_0(%arg0: i32) -> (i32, i32) {
    %c0_i32 = arith.constant 0 : i32
    %c0_i32_0 = arith.constant 0 : i32
    return %arg0, %c0_i32 : i32, i32
  }
  func.func @transform_1(%arg0: i32) -> (i32, i32) {
    %c0_i32 = arith.constant 0 : i32
    %c0_i32_0 = arith.constant 0 : i32
    %c0_i32_1 = arith.constant 0 : i32
    return %c0_i32, %c0_i32_0 : i32, i32
  }
  func.func @transform_2(%arg0: i32) -> (i32, i32) {
    %c0_i32 = arith.constant 0 : i32
    %c0_i32_0 = arith.constant 0 : i32
    %c0_i32_1 = arith.constant 0 : i32
    return %c0_i32, %c0_i32_0 : i32, i32
  }
  func.func @transform_3(%arg0: i32) -> (i32, i32) {
    %c0_i32 = arith.constant 0 : i32
    %c0_i32_0 = arith.constant 0 : i32
    return %arg0, %c0_i32 : i32, i32
  }
}

</mosaic_0001>

<llo_original>
// kernel: tpu_custom_call.1
$region0: #{tpu_custom_call.1}
  #allocation0 [shape = 'u32[]', space=smem, size = 0x4, offset = 0x4, fixed_abs, tag = 'smem constant byte address 0x4 - core index']
  #allocation1 [shape = 'u32[144,128]{1,0:T(1,128)}', space=vmem, size = 0x12000, scoped, tag = 'internal scratch']
  %s0 = inlined_call_operand.hbm [shape: f32[16,32], index: 0, kind: input, shape index: {}]
  %s1 = inlined_call_operand.hbm [shape: f32[32,32], index: 1, kind: input, shape index: {}]
  %s2 = inlined_call_operand.vmem [shape: f32[1,32], index: 2, kind: input, shape index: {}]
  %s3 = inlined_call_operand.hbm [shape: f32[16,32], index: 3, kind: output, shape index: {}]
  %s4 = sld [smem:[#allocation0]]
  $region30: #{tpu_custom_call.1} parent=0
    _
  %s6 = ssub.s32 1, %s4
  %s7 = scalar_select 0, %s6, %s4
  $region1: #{tpu_custom_call.1} parent=0
    #allocation2 [shape = 'u8[8192]{0}', space=vmem, size = 0x2000, scoped, tag = 'input window, operand 0, single buffered']
    #allocation3 [shape = 's32[1]{0}', space=sflag, size = 0x4, scoped, tag = 'scoped memory for tpu_custom_call.1']
    #allocation4 [shape = 's32[1]{0}', space=sflag, size = 0x4, scoped, tag = 'scoped memory for tpu_custom_call.1']
    #allocation5 [shape = 'u8[16384]{0}', space=vmem, size = 0x4000, scoped, tag = 'input window, operand 1, single buffered']
    #allocation6 [shape = 's32[1]{0}', space=sflag, size = 0x4, scoped, tag = 'scoped memory for tpu_custom_call.1']
    #allocation7 [shape = 'u8[8192]{0}', space=vmem, size = 0x2000, scoped, tag = 'output window, operand 0, single buffered']
    %8 = vsyncpa [#allocation3], 0
    %9 = vsyncpa [#allocation6], 0
    %10 = vsyncpa [#allocation4], 0
    // Predicated region
    $region2: #{tpu_custom_call.1} parent=1 // pred_check
      _
    $region3: #{tpu_custom_call.1} parent=1 // pred_check_branch
      %12 = sbr.rel (0) target = $region5
    $region4: #{tpu_custom_call.1} parent=1 // pred_region
      %s14 = ssub.s32 256, 256
      %15 = vsyncadd [#allocation3], %s14
      %s16 = sshll.u32 [#allocation2], 4
      %s17 = int_to_ptr.vmem [resolvable:$true] %s16
      %22 = dma.hbm_to_vmem [thread:$0]  %s0, 256, %s17, [#allocation3], 128, 128, 8
    $region5: #{tpu_custom_call.1} parent=1 // pred_fallthru
      _
    // Predicated region
    $region6: #{tpu_custom_call.1} parent=1 // pred_check
      _
    $region7: #{tpu_custom_call.1} parent=1 // pred_check_branch
      %24 = sbr.rel (0) target = $region9
    $region8: #{tpu_custom_call.1} parent=1 // pred_region
      %s26 = ssub.s32 512, 512
      %27 = vsyncadd [#allocation6], %s26
      %s28 = sshll.u32 [#allocation5], 4
      %s29 = int_to_ptr.vmem [resolvable:$true] %s28
      %34 = dma.hbm_to_vmem [thread:$0]  %s1, 512, %s29, [#allocation6], 128, 128, 8
    $region9: #{tpu_custom_call.1} parent=1 // pred_fallthru
      _
    // Predicated region
    $region10: #{tpu_custom_call.1} parent=1 // pred_check
      _
    $region11: #{tpu_custom_call.1} parent=1 // pred_check_branch
      %36 = sbr.rel (0) target = $region13
    $region12: #{tpu_custom_call.1} parent=1 // pred_region
      _
    $region13: #{tpu_custom_call.1} parent=1 // pred_fallthru
      _
    // Predicated region
    $region14: #{tpu_custom_call.1} parent=1 // pred_check
      _
    $region15: #{tpu_custom_call.1} parent=1 // pred_check_branch
      %38 = sbr.rel (0) target = $region17
    $region16: #{tpu_custom_call.1} parent=1 // pred_region
      %39 = dma.done [#allocation3], 256
    $region17: #{tpu_custom_call.1} parent=1 // pred_fallthru
      _
    // Predicated region
    $region18: #{tpu_custom_call.1} parent=1 // pred_check
      _
    $region19: #{tpu_custom_call.1} parent=1 // pred_check_branch
      %41 = sbr.rel (0) target = $region21
    $region20: #{tpu_custom_call.1} parent=1 // pred_region
      %42 = dma.done [#allocation6], 512
    $region21: #{tpu_custom_call.1} parent=1 // pred_fallthru
      _
    %v43 = vld [vmem:[#allocation2] sm:$0xff]
    %v44 = vld [vmem:[#allocation2 + $0x8] sm:$0xff]
    %v45 = vld [vmem:[#allocation5] sm:$0xff]
    %v46 = vld [vmem:[#allocation5 + $0x8] sm:$0xff]
    %v47 = vld [vmem:[#allocation5 + $0x10] sm:$0xff]
    %v48 = vld [vmem:[#allocation5 + $0x18] sm:$0xff]
    %v49 = vld [vmem:[%s2] sm:$0x1]
    %v51 = vlaneseq
    %v52 = vshrl.u32 %v51, 7
    %v53 = vsub.s32 0, %v52
    %v54 = vrot.slane %v49, %v53
    %vm56 = vcmask 261120
    %v58 = vsel %vm56, %v43, 0
    %v61 = vsel %vm56, %v44, 0
    %v64 = vsel %vm56, %v45, 0
    %v67 = vsel %vm56, %v46, 0
    %v70 = vsel %vm56, %v47, 0
    %v73 = vsel %vm56, %v48, 0
    %75 = vmatprep.subr.mxu0 0.0
    %76 = vmatpush1.xpose.msra.mxu0 0.0
    %77 = vmatprep.subr.mxu0 0.0
    %78 = vmatpush1.xpose.msra.mxu0 0.0
    %79 = vmatprep.subr.mxu0 0.0
    %80 = vmatpush1.xpose.msra.mxu0 0.0
    %81 = vmatprep.subr.mxu0 0.0
    %82 = vmatpush1.xpose.msra.mxu0 0.0
    %83 = vmatprep.subr.mxu0 0.0
    %84 = vmatpush1.xpose.msra.mxu0 0.0
    %85 = vmatprep.subr.mxu0 0.0
    %86 = vmatpush1.xpose.msra.mxu0 0.0
    %87 = vmatprep.subr.mxu0 0.0
    %88 = vmatpush1.xpose.msra.mxu0 0.0
    %89 = vmatprep.subr.mxu0 0.0
    %90 = vmatpush1.xpose.msra.mxu0 0.0
    %91 = vmatprep.subr.mxu0 0.0
    %92 = vmatpush1.xpose.msra.mxu0 0.0
    %93 = vmatprep.subr.mxu0 0.0
    %94 = vmatpush1.xpose.msra.mxu0 0.0
    %95 = vmatprep.subr.mxu0 0.0
    %96 = vmatpush1.xpose.msra.mxu0 0.0
    %97 = vmatprep.subr.mxu0 0.0
    %98 = vmatpush1.xpose.msra.mxu0 0.0
    %99 = vmatprep.subr.mxu0 0.0
    %100 = vmatpush1.xpose.msra.mxu0 %v73
    %101 = vmatprep.subr.mxu0 0.0
    %102 = vmatpush1.xpose.msra.mxu0 %v70
    %103 = vmatprep.subr.mxu0 0.0
    %104 = vmatpush1.xpose.msra.mxu0 %v67
    %105 = vmatprep.subr.mxu0 0.0
    %106 = vmatpush1.xpose.msra.mxu0 %v64
    %107 = vmatprep.subr.mxu0 0.0
    %108 = vmatpush2.xpose.msra.mxu0 0.0
    %109 = vmatprep.subr.mxu0 0.0
    %110 = vmatpush2.xpose.msra.mxu0 0.0
    %111 = vmatprep.subr.mxu0 0.0
    %112 = vmatpush2.xpose.msra.mxu0 0.0
    %113 = vmatprep.subr.mxu0 0.0
    %114 = vmatpush2.xpose.msra.mxu0 0.0
    %115 = vmatprep.subr.mxu0 0.0
    %116 = vmatpush2.xpose.msra.mxu0 0.0
    %117 = vmatprep.subr.mxu0 0.0
    %118 = vmatpush2.xpose.msra.mxu0 0.0
    %119 = vmatprep.subr.mxu0 0.0
    %120 = vmatpush2.xpose.msra.mxu0 0.0
    %121 = vmatprep.subr.mxu0 0.0
    %122 = vmatpush2.xpose.msra.mxu0 0.0
    %123 = vmatprep.subr.mxu0 0.0
    %124 = vmatpush2.xpose.msra.mxu0 0.0
    %125 = vmatprep.subr.mxu0 0.0
    %126 = vmatpush2.xpose.msra.mxu0 0.0
    %127 = vmatprep.subr.mxu0 0.0
    %128 = vmatpush2.xpose.msra.mxu0 0.0
    %129 = vmatprep.subr.mxu0 0.0
    %130 = vmatpush2.xpose.msra.mxu0 0.0
    %131 = vmatprep.subr.mxu0 0.0
    %132 = vmatpush2.xpose.msra.mxu0 0.0
    %133 = vmatprep.subr.mxu0 0.0
    %134 = vmatpush2.xpose.msra.mxu0 0.0
    %135 = vmatprep.subr.mxu0 0.0
    %136 = vmatpush2.xpose.msra.mxu0 0.0
    %137 = vmatprep.subr.mxu0 0.0
    %138 = vmatpush2.xpose.msra.mxu0 0.0
    %139 = vmatprep.mubr.f32.mxu0 0.0
    %140 = vmatmul.mubr.f32.gmra.mxu0 %v58
    %v141 = vpop.f32.mrf.mxu0
    %v142 = vadd.f32 %v54, %v141
    %v143 = vpop.f32.mrf.mxu0
    %144 = vmatprep.mubr.f32.mxu0 0.0
    %145 = vmatmul.mubr.f32.gmra.mxu0 %v61
    %v146 = vpop.f32.mrf.mxu0
    %v147 = vadd.f32 %v54, %v146
    %v148 = vpop.f32.mrf.mxu0
    %149 = vdwg.mxu0
    %v150 = vmul.f32 %v142, 0.17677669
    %v151 = vmul.f32 %v147, 0.17677669
    %152 = vst.msk [vmem:[#allocation7] sm:$0xff] %vm56, %v150
    %153 = vst.msk [vmem:[#allocation7 + $0x8] sm:$0xff] %vm56, %v151
    // Predicated region
    $region22: #{tpu_custom_call.1} parent=1 // pred_check
      _
    $region23: #{tpu_custom_call.1} parent=1 // pred_check_branch
      %155 = sbr.rel (0) target = $region25
    $region24: #{tpu_custom_call.1} parent=1 // pred_region
      %s157 = ssub.s32 256, 256
      %158 = vsyncadd [#allocation4], %s157
      %s159 = sshll.u32 [#allocation7], 4
      %s160 = int_to_ptr.vmem [resolvable:$true] %s159
      %165 = dma.vmem_to_hbm [thread:$0]  %s160, 256, %s3, [#allocation4], 128, 128, 8
    $region25: #{tpu_custom_call.1} parent=1 // pred_fallthru
      _
    // Predicated region
    $region26: #{tpu_custom_call.1} parent=1 // pred_check
      _
    $region27: #{tpu_custom_call.1} parent=1 // pred_check_branch
      %167 = sbr.rel (0) target = $region29
    $region28: #{tpu_custom_call.1} parent=1 // pred_region
      %168 = dma.done [#allocation4], 256
    $region29: #{tpu_custom_call.1} parent=1 // pred_fallthru
      _
    %169 = vsyncpa [#allocation3], 1
    %170 = vsyncpa [#allocation6], 1
    %171 = vsyncpa [#allocation4], 1

</llo_original>
